<compile_context>
chip_gen: v6e
topology: v6e:2x2x1
jax: 0.10.0
libtpu: 0.0.40
codegen_flags: <defaults>
</compile_context>

<pallas_src>
import jax
import jax.numpy as jnp
from jax import lax
from jax.experimental import pallas as pl
from jax.experimental.pallas import tpu as pltpu


def _pick_tile(hw, max_tile=2048):
    """Largest lane-dense tile (multiple of 128) dividing hw, capped at max_tile."""
    if hw % 128 != 0:
        return hw                       # single full block (full dims are legal)
    t = min(max_tile, hw)
    t -= t % 128
    while hw % t != 0:
        t -= 128
    return t


# ----------------------------------------------------------------------------
# Kernel A (inference path): 1x1 conv + sigmoid, lane-dense, parallel grid
# ----------------------------------------------------------------------------
def classifier_forward(x, w, b, *, tile_hw):
    """x: [B, C, HW] f32, w: [1, C, 1] f32, b: [1, 1, 1] f32 -> pred [B, HW]."""
    B, C, HW = x.shape
    T = tile_hw
    nt = HW // T

    def kernel(x_ref, w_ref, b_ref, o_ref):
        xv = x_ref[...]                                    # [B, C, T]
        wv = w_ref[...]                                    # [1, C, 1]
        logits = jnp.sum(xv * wv, axis=1) + b_ref[0, 0]    # [B, T]
        o_ref[...] = jax.nn.sigmoid(logits)

    return pl.pallas_call(
        kernel,
        out_shape=jax.ShapeDtypeStruct((B, HW), jnp.float32),
        grid=(nt,),
        in_specs=[
            pl.BlockSpec((B, C, T), lambda i: (0, 0, i)),
            pl.BlockSpec((1, C, 1), lambda i: (0, 0, 0)),
            pl.BlockSpec((1, 1, 1), lambda i: (0, 0, 0)),
        ],
        out_specs=pl.BlockSpec((B, T), lambda i: (0, i)),
        compiler_params=pltpu.CompilerParams(dimension_semantics=("parallel",)),
    )(x, w, b)


# ----------------------------------------------------------------------------
# Kernel A+B (training path): classifier + partedCE + accuracy, fused
# ----------------------------------------------------------------------------
def classifier_and_loss(x, w, b, labels, *, tile_hw, ignore_index=255):
    """x: [B, C, HW] f32, labels: [B, HW] int32 (values {0,1,ignore}).

    Returns (pred [B, HW], partedCE scalar, accuracy scalar).
    """
    B, C, HW = x.shape
    T = tile_hw
    nt = HW // T
    Bf = float(B)

    def kernel(x_ref, w_ref, b_ref, lab_ref, pred_ref, pce_ref, acc_ref, sums):
        step = pl.program_id(0)

        @pl.when(step == 0)
        def _init():
            for k in range(6):
                sums[k] = jnp.float32(0.0)

        # --- 1x1 conv + sigmoid (VPU weighted channel sum, lane-dense out) ---
        xv = x_ref[...]                                    # [B, C, T]
        wv = w_ref[...]                                    # [1, C, 1]
        logits = jnp.sum(xv * wv, axis=1) + b_ref[0, 0]    # [B, T]
        p = jax.nn.sigmoid(logits)
        pred_ref[...] = p

        # --- partial CE over the two "logits" (1-p, p), log-softmax form ---
        lab = lab_ref[...]                                 # [B, T] int32
        logit_bg = 1.0 - p
        logit_fg = p
        m = jnp.maximum(logit_bg, logit_fg)
        # lse = max + log(1 + exp(-|1-2p|))  (one exp + one log per pixel)
        lse = m + jnp.log(1.0 + jnp.exp(-jnp.abs(1.0 - 2.0 * p)))
        nll_bg = lse - logit_bg
        nll_fg = lse - logit_fg
        bg_valid = lab == 0
        fg_valid = jnp.logical_and(lab != 0, lab != ignore_index)
        sums[0] += jnp.sum(jnp.where(bg_valid, nll_bg, 0.0))
        sums[1] += jnp.sum(jnp.where(fg_valid, nll_fg, 0.0))
        sums[2] += jnp.sum(bg_valid.astype(jnp.float32))
        sums[3] += jnp.sum(fg_valid.astype(jnp.float32))

        # --- accuracy: closed form of PyTorch's [B,1,H,W] vs [B,H,W] broadcast
        #     num = sum_{j,p valid} (lab==1 ? s[p] : B - s[p]),  den = B*#valid,
        #     where s[p] = #samples predicting 1 at pixel p. O(B*T), no [B,B,T].
        pred1 = (p > 0.5).astype(jnp.float32)              # [B, T]
        s_p = jnp.sum(pred1, axis=0, keepdims=True)        # [1, T]
        match = jnp.where(lab == 1, s_p,
                          jnp.where(lab == 0, Bf - s_p, 0.0))
        sums[4] += jnp.sum(match)
        sums[5] += jnp.sum((lab != ignore_index).astype(jnp.float32))

        @pl.when(step == nt - 1)
        def _finalize():
            # guard empty fg/bg sets (would be 0/0 -> NaN otherwise)
            ce_bg = jnp.where(sums[2] > 0.0, sums[0] / sums[2], 0.0)
            ce_fg = jnp.where(sums[3] > 0.0, sums[1] / sums[3], 0.0)
            acc = jnp.where(sums[5] > 0.0, sums[4] / (Bf * sums[5]), 0.0)
            pce_ref[...] = jnp.full((1, 1), ce_bg + ce_fg, jnp.float32)
            acc_ref[...] = jnp.full((1, 1), acc, jnp.float32)

    pred, pce, acc = pl.pallas_call(
        kernel,
        out_shape=(
            jax.ShapeDtypeStruct((B, HW), jnp.float32),
            jax.ShapeDtypeStruct((1, 1), jnp.float32),
            jax.ShapeDtypeStruct((1, 1), jnp.float32),
        ),
        grid=(nt,),
        in_specs=[
            pl.BlockSpec((B, C, T), lambda i: (0, 0, i)),
            pl.BlockSpec((1, C, 1), lambda i: (0, 0, 0)),
            pl.BlockSpec((1, 1, 1), lambda i: (0, 0, 0)),
            pl.BlockSpec((B, T), lambda i: (0, i)),
        ],
        out_specs=(
            pl.BlockSpec((B, T), lambda i: (0, i)),
            pl.BlockSpec((1, 1), lambda i: (0, 0)),
            pl.BlockSpec((1, 1), lambda i: (0, 0)),
        ),
        scratch_shapes=[pltpu.SMEM((6,), jnp.float32)],
        compiler_params=pltpu.CompilerParams(dimension_semantics=("arbitrary",)),
    )(x, w, b, labels)
    return pred, pce[0, 0], acc[0, 0]


# ----------------------------------------------------------------------------
# Kernel C: SaliencyStructureConsistency (SSIM + L1), alpha = 0.85
# ----------------------------------------------------------------------------
def ssc_loss_fn(x, y):
    """x, y: [B, C, H, W] f32. Mean SSIM-dissimilarity + L1, tiled over B*C."""
    B, C, H, W = x.shape
    BC = B * C
    xf = x.reshape(BC, H, W)
    yf = y.reshape(BC, H, W)
    n_elems = float(BC * H * W)
    alpha = 0.85
    c1 = 0.01 ** 2
    c2 = 0.03 ** 2

    def box3(z):
        # AvgPool2d(3, 1, 1), count_include_pad=True -> shift-and-add / 9.
        # Shifts use the XLU (pltpu.roll); wrapped boundary columns/rows are
        # masked to zero to emulate zero padding.
        row = lax.broadcasted_iota(jnp.int32, (H, W), 0)
        col = lax.broadcasted_iota(jnp.int32, (H, W), 1)
        left = jnp.where(col > 0, pltpu.roll(z, 1, axis=1), 0.0)         # z[:, w-1]
        right = jnp.where(col < W - 1, pltpu.roll(z, W - 1, axis=1), 0.0)  # z[:, w+1]
        horiz = z + left + right
        up = jnp.where(row > 0, pltpu.roll(horiz, 1, axis=0), 0.0)        # [h-1, :]
        down = jnp.where(row < H - 1, pltpu.roll(horiz, H - 1, axis=0), 0.0)
        return (horiz + up + down) * (1.0 / 9.0)

    def kernel(x_ref, y_ref, o_ref, sums):
        step = pl.program_id(0)

        @pl.when(step == 0)
        def _init():
            sums[0] = jnp.float32(0.0)
            sums[1] = jnp.float32(0.0)

        xs = x_ref[0]                                      # [H, W]
        ys = y_ref[0]
        mu_x = box3(xs)
        mu_y = box3(ys)
        mu_xy = mu_x * mu_y
        mu_x2 = mu_x * mu_x
        mu_y2 = mu_y * mu_y
        sigma_x = box3(xs * xs) - mu_x2
        sigma_y = box3(ys * ys) - mu_y2
        sigma_xy = box3(xs * ys) - mu_xy
        ssim_n = (2.0 * mu_xy + c1) * (2.0 * sigma_xy + c2)
        ssim_d = (mu_x2 + mu_y2 + c1) * (sigma_x + sigma_y + c2)
        ssim_map = jnp.clip((1.0 - ssim_n / ssim_d) * 0.5, 0.0, 1.0)
        sums[0] += jnp.sum(ssim_map)
        sums[1] += jnp.sum(jnp.abs(xs - ys))

        @pl.when(step == BC - 1)
        def _finalize():
            loss = (alpha * sums[0] + (1.0 - alpha) * sums[1]) / n_elems
            o_ref[...] = jnp.full((1, 1), loss, jnp.float32)

    out = pl.pallas_call(
        kernel,
        out_shape=jax.ShapeDtypeStruct((1, 1), jnp.float32),
        grid=(BC,),
        in_specs=[
            pl.BlockSpec((1, H, W), lambda i: (i, 0, 0)),
            pl.BlockSpec((1, H, W), lambda i: (i, 0, 0)),
        ],
        out_specs=pl.BlockSpec((1, 1), lambda i: (0, 0)),
        scratch_shapes=[pltpu.SMEM((2,), jnp.float32)],
        compiler_params=pltpu.CompilerParams(dimension_semantics=("arbitrary",)),
    )(xf, yf)
    return out[0, 0]


# ----------------------------------------------------------------------------
# Forward (glue in plain JAX; reshapes only, no transposes)
# ----------------------------------------------------------------------------
def saliency_classifier_forward(params, datas, targets=None, config=None):
    config = dict(config or {})
    num_classes = config.get('num_classes', 2)
    ignore_index = config.get('ignore_index', 255)
    ssc_w = config.get('ssc_loss_weight', 0.0)
    max_tile = config.get('max_tile_hw', 2048)

    div1 = datas['div1']                                   # [B, C, H, W]
    B, C, H, W = div1.shape
    HW = H * W
    T = _pick_tile(HW, max_tile)

    x = div1.reshape(B, C, HW)
    w = params['w'].reshape(1, C, 1).astype(jnp.float32)
    b = params['b'].reshape(1, 1, 1).astype(jnp.float32)

    targets = targets if targets is not None else {}
    labels = targets.get('semantic_label', None)

    parted_ce = l1_crf = ssc = acc = None

    if labels is None:
        pred = classifier_forward(x, w, b, tile_hw=T)
    else:
        labels = jnp.where(labels >= num_classes, ignore_index, labels)
        labels = labels.reshape(B, HW).astype(jnp.int32)
        pred, parted_ce, acc = classifier_and_loss(
            x, w, b, labels, tile_hw=T, ignore_index=ignore_index)
        if ssc_w > 0.0:
            ssc = ssc_loss_fn(datas['div1_r'], datas['div1']) * ssc_w
        # l1_crf_loss: skipped (crf loss weights == 0 -> loss_lsc is None)

    semantic_pred = pred.reshape(B, 1, H, W)
    return {'semantic_pred': semantic_pred,
            'partedCE_loss': parted_ce,
            'l1_crf_loss': l1_crf,
            'ssc_loss': ssc,
            'accuracy': acc}


if __name__ == "__main__":
    key = jax.random.PRNGKey(0)
    kx, kr, kl, kw, kb = jax.random.split(key, 5)

    B, C, H, W = 2, 4, 16, 16
    div1 = jax.random.uniform(kx, (B, C, H, W), dtype=jnp.float32)
    div1_r = jnp.clip(
        div1 + 0.05 * jax.random.normal(kr, (B, C, H, W), dtype=jnp.float32),
        0.0, 1.0)
    # labels in {0,1,2,3}; values >= num_classes(2) get mapped to ignore(255)
    labels = jax.random.randint(kl, (B, H, W), 0, 4, dtype=jnp.int32)

    params = {
        'w': 0.5 * jax.random.normal(kw, (C,), dtype=jnp.float32),
        'b': 0.1 * jax.random.normal(kb, (1,), dtype=jnp.float32),
    }
    config = dict(num_classes=2, ignore_index=255, ssc_loss_weight=0.3,
                  l1_crf_loss_weight=0.0, feat_crf_loss_weight=0.0,
                  img_size=H, max_tile_hw=128)   # tile=128 -> multi-step grid

    # inference path (no labels): classifier only, parallel grid
    out_infer = saliency_classifier_forward(
        params, {'div1': div1, 'div1_r': div1_r}, None, config)

    # training path: fused classifier + partedCE + accuracy, plus SSC loss
    outputs = saliency_classifier_forward(
        params, {'div1': div1, 'div1_r': div1_r},
        {'semantic_label': labels}, config)

    jax.block_until_ready((out_infer['semantic_pred'],
                           outputs['semantic_pred'],
                           outputs['partedCE_loss'],
                           outputs['ssc_loss'],
                           outputs['accuracy']))
    print("KERNEL_OK")
</pallas_src>

<mosaic_0001>
module attributes {stable_mosaic.version = 11 : i64} {
  func.func @kernel(%arg0: i32, %arg1: memref<2x4x128xf32, #tpu.memory_space<vmem>>, %arg2: memref<1x4x1xf32, #tpu.memory_space<vmem>>, %arg3: memref<1x1x1xf32, #tpu.memory_space<vmem>>, %arg4: memref<2x128xf32, #tpu.memory_space<vmem>>) attributes {dimension_semantics = [#tpu.dimension_semantics<parallel>], iteration_bounds = array<i64: 2>, scalar_prefetch = 0 : i64, scratch_operands = 0 : i64, tpu.core_type = #tpu.core_type<tc>, window_params = [{transform_indices = @transform_0, window_bounds = array<i64: 2, 4, 128>}, {pipeline_mode = #tpu.pipeline_mode<synchronous>, transform_indices = @transform_1, window_bounds = array<i64: 1, 4, 1>}, {pipeline_mode = #tpu.pipeline_mode<synchronous>, transform_indices = @transform_2, window_bounds = array<i64: 1, 1, 1>}, {transform_indices = @transform_3, window_bounds = array<i64: 2, 128>}]} {
    %c0 = arith.constant 0 : index
    %c0_0 = arith.constant 0 : index
    %c0_1 = arith.constant 0 : index
    %0 = vector.load %arg1[%c0, %c0_0, %c0_1] : memref<2x4x128xf32, #tpu.memory_space<vmem>>, vector<2x4x128xf32>
    %c0_2 = arith.constant 0 : index
    %c0_3 = arith.constant 0 : index
    %c0_4 = arith.constant 0 : index
    %1 = vector.load %arg2[%c0_2, %c0_3, %c0_4] : memref<1x4x1xf32, #tpu.memory_space<vmem>>, vector<1x4x1xf32>
    %2 = vector.broadcast %1 : vector<1x4x1xf32> to vector<2x4x128xf32>
    %3 = arith.mulf %0, %2 : vector<2x4x128xf32>
    %cst = arith.constant dense<0.000000e+00> : vector<2x128xf32>
    %4 = vector.multi_reduction <add>, %3, %cst [1] : vector<2x4x128xf32> to vector<2x128xf32>
    %c0_5 = arith.constant 0 : index
    %c0_6 = arith.constant 0 : index
    %c0_7 = arith.constant 0 : index
    %5 = vector.load %arg3[%c0_5, %c0_6, %c0_7] : memref<1x1x1xf32, #tpu.memory_space<vmem>>, vector<1x1x1xf32>
    %6 = vector.shape_cast %5 : vector<1x1x1xf32> to vector<1xf32>
    %7 = vector.shape_cast %6 : vector<1xf32> to vector<1x1xf32>
    %8 = vector.broadcast %7 : vector<1x1xf32> to vector<2x128xf32>
    %9 = arith.addf %4, %8 : vector<2x128xf32>
    %10 = arith.negf %9 : vector<2x128xf32>
    %11 = math.exp %10 : vector<2x128xf32>
    %cst_8 = arith.constant 1.000000e+00 : f32
    %12 = vector.broadcast %cst_8 : f32 to vector<2x128xf32>
    %13 = arith.addf %12, %11 : vector<2x128xf32>
    %14 = arith.divf %12, %13 : vector<2x128xf32>
    %c0_9 = arith.constant 0 : index
    %c0_10 = arith.constant 0 : index
    %15 = vector.load %arg4[%c0_9, %c0_10] : memref<2x128xf32, #tpu.memory_space<vmem>>, vector<2x128xf32>
    tpu.vector_store %arg4[%c0_9, %c0_10], %14 {strides = array<i32>} : memref<2x128xf32, #tpu.memory_space<vmem>>, vector<2x128xf32>,
    return
  }
  func.func @transform_0(%arg0: i32) -> (i32, i32, i32) {
    %c0_i32 = arith.constant 0 : i32
    %c0_i32_0 = arith.constant 0 : i32
    %c0_i32_1 = arith.constant 0 : i32
    return %c0_i32, %c0_i32_0, %arg0 : i32, i32, i32
  }
  func.func @transform_1(%arg0: i32) -> (i32, i32, i32) {
    %c0_i32 = arith.constant 0 : i32
    %c0_i32_0 = arith.constant 0 : i32
    %c0_i32_1 = arith.constant 0 : i32
    %c0_i32_2 = arith.constant 0 : i32
    return %c0_i32, %c0_i32_0, %c0_i32_1 : i32, i32, i32
  }
  func.func @transform_2(%arg0: i32) -> (i32, i32, i32) {
    %c0_i32 = arith.constant 0 : i32
    %c0_i32_0 = arith.constant 0 : i32
    %c0_i32_1 = arith.constant 0 : i32
    %c0_i32_2 = arith.constant 0 : i32
    return %c0_i32, %c0_i32_0, %c0_i32_1 : i32, i32, i32
  }
  func.func @transform_3(%arg0: i32) -> (i32, i32) {
    %c0_i32 = arith.constant 0 : i32
    %c0_i32_0 = arith.constant 0 : i32
    return %c0_i32, %arg0 : i32, i32
  }
}

</mosaic_0001>

<llo_original>
// kernel: tpu_custom_call.1
$region0: #{tpu_custom_call.1}
  #allocation0 [shape = 'u32[]', space=smem, size = 0x4, offset = 0x4, fixed_abs, tag = 'smem constant byte address 0x4 - core index']
  #allocation1 [shape = 'u32[144,128]{1,0:T(1,128)}', space=vmem, size = 0x12000, scoped, tag = 'internal scratch']
  #allocation2 [shape = 'f32[1,1,1]{2,1,0:T(1,128)S(1)}', space=vmem, size = 0x200, scoped, tag = 'scoped memory for tpu_custom_call.1']
  %s0 = inlined_call_operand.hbm [shape: f32[2,4,256], index: 0, kind: input, shape index: {}]
  %s1 = inlined_call_operand.vmem [shape: f32[1,4,1], index: 1, kind: input, shape index: {}]
  %s2 = inlined_call_operand.<no memory space> [shape: f32[1,1,1], index: 2, kind: input, shape index: {}]
  %s3 = inlined_call_operand.hbm [shape: f32[2,256], index: 3, kind: output, shape index: {}]
  %s4 = sld [smem:[#allocation0]]
  $region49: #{tpu_custom_call.1} parent=0
    _
  %s6 = ssub.s32 1, %s4
  %s7 = scalar_select 0, %s6, %s4
  %v8 = vstv %s2
  %9 = vst [vmem:[#allocation2] sm:$0x1] %v8
  $region1: #{tpu_custom_call.1} parent=0
    #allocation3 [shape = 'u8[8192]{0}', space=vmem, size = 0x2000, scoped, tag = 'input window, operand 0']
    #allocation4 [shape = 's32[2]{0}', space=sflag, size = 0x8, scoped, tag = 'scoped memory for tpu_custom_call.1']
    #allocation5 [shape = 's32[2]{0}', space=sflag, size = 0x8, scoped, tag = 'scoped memory for tpu_custom_call.1']
    #allocation6 [shape = 'u8[2048]{0}', space=vmem, size = 0x800, scoped, tag = 'output window, operand 0']
    %10 = vsyncpa [#allocation4], 0
    %s11 = scalar_lea.sflag [#allocation4], 1
    %12 = vsyncpa %s11, 0
    %13 = vsyncpa [#allocation5], 0
    %s14 = scalar_lea.sflag [#allocation5], 1
    %15 = vsyncpa %s14, 0
    loop: start=0, step=1, limit=4
    $region2: #{tpu_custom_call.1} parent=1 // loop_pre_header
      _
    $region3: #{tpu_custom_call.1} parent=1 // loop_header
      %s17 = sphi 0, %s21
      %p18 = scmp.ge.s32.totalorder %s17, 4
      %s27 = sphi 0, %s29
      %s30 = sphi 0, %s27
      %s31 = sphi 0, %s30
      %s47 = sphi 0, %s31
      %s51 = sphi 0, %s51
      %s53 = sphi 0, %s51
      %s54 = sphi 0, %s53
      %s68 = sphi 0, %s54
      %s72 = sphi 0, %s72
      %s74 = sphi 0, %s72
      %s75 = sphi 0, %s74
      %s89 = sphi 0, %s75
      %s95 = sphi 0, %s97
      %s98 = sphi 0, %s95
      %s99 = sphi 0, %s98
      %s115 = sphi 0, %s99
    $region4: #{tpu_custom_call.1} parent=1 // loop_header_branch
      %20 = sbr.rel (%p18) target = $region8
    $region5: #{tpu_custom_call.1} parent=1 // loop_body
      %s22 = ssub.s32 %s17, 1
      %s23 = ssub.s32 %s17, 2
      %s24 = sadd.s32 %s17, 1
      %s25 = ssub.s32 %s17, %s24
      %p26 = scmp.eq.s32.totalorder %s25, 0
      %s28 = sadd.s32 %s27, 1
      %s29 = scalar_select %p26, %s27, %s28
      %p32 = pneg %p26
      %p33 = scmp.eq.s32.totalorder %s17, 1
      %p34 = por %p32, %p33
      %p35 = scmp.ne.s32.totalorder %s27, %s30
      %p36 = scmp.eq.s32.totalorder %s17, 0
      %p37 = por %p35, %p36
      %p38 = scmp.ne.s32.totalorder %s27, %s30
      %p39 = scmp.eq.s32.totalorder %s22, 1
      %p40 = por %p38, %p39
      %p41 = scmp.ne.s32.totalorder %s30, %s31
      %p42 = scmp.eq.s32.totalorder %s22, 0
      %p43 = por %p41, %p42
      %p44 = scmp.ne.s32.totalorder %s30, %s31
      %p45 = scmp.eq.s32.totalorder %s23, 1
      %p46 = por %p44, %p45
      %p48 = scmp.ne.s32.totalorder %s31, %s47
      %p49 = scmp.eq.s32.totalorder %s23, 0
      %p50 = por %p48, %p49
      %s52 = sadd.s32 %s51, 1
      %p55 = scmp.eq.s32.totalorder %s17, 1
      %p56 = scmp.ne.s32.totalorder %s51, %s53
      %p57 = scmp.eq.s32.totalorder %s17, 0
      %p58 = por %p56, %p57
      %p59 = scmp.ne.s32.totalorder %s51, %s53
      %p60 = scmp.eq.s32.totalorder %s22, 1
      %p61 = por %p59, %p60
      %p62 = scmp.ne.s32.totalorder %s53, %s54
      %p63 = scmp.eq.s32.totalorder %s22, 0
      %p64 = por %p62, %p63
      %p65 = scmp.ne.s32.totalorder %s53, %s54
      %p66 = scmp.eq.s32.totalorder %s23, 1
      %p67 = por %p65, %p66
      %p69 = scmp.ne.s32.totalorder %s54, %s68
      %p70 = scmp.eq.s32.totalorder %s23, 0
      %p71 = por %p69, %p70
      %s73 = sadd.s32 %s72, 1
      %p76 = scmp.eq.s32.totalorder %s17, 1
      %p77 = scmp.ne.s32.totalorder %s72, %s74
      %p78 = scmp.eq.s32.totalorder %s17, 0
      %p79 = por %p77, %p78
      %p80 = scmp.ne.s32.totalorder %s72, %s74
      %p81 = scmp.eq.s32.totalorder %s22, 1
      %p82 = por %p80, %p81
      %p83 = scmp.ne.s32.totalorder %s74, %s75
      %p84 = scmp.eq.s32.totalorder %s22, 0
      %p85 = por %p83, %p84
      %p86 = scmp.ne.s32.totalorder %s74, %s75
      %p87 = scmp.eq.s32.totalorder %s23, 1
      %p88 = por %p86, %p87
      %p90 = scmp.ne.s32.totalorder %s75, %s89
      %p91 = scmp.eq.s32.totalorder %s23, 0
      %p92 = por %p90, %p91
      %s93 = ssub.s32 %s17, %s24
      %p94 = scmp.eq.s32.totalorder %s93, 0
      %s96 = sadd.s32 %s95, 1
      %s97 = scalar_select %p94, %s95, %s96
      %p100 = pneg %p94
      %p101 = scmp.eq.s32.totalorder %s17, 1
      %p102 = por %p100, %p101
      %p103 = scmp.ne.s32.totalorder %s95, %s98
      %p104 = scmp.eq.s32.totalorder %s17, 0
      %p105 = por %p103, %p104
      %p106 = scmp.ne.s32.totalorder %s95, %s98
      %p107 = scmp.eq.s32.totalorder %s22, 1
      %p108 = por %p106, %p107
      %p109 = scmp.ne.s32.totalorder %s98, %s99
      %p110 = scmp.eq.s32.totalorder %s22, 0
      %p111 = por %p109, %p110
      %p112 = scmp.ne.s32.totalorder %s98, %s99
      %p113 = scmp.eq.s32.totalorder %s23, 1
      %p114 = por %p112, %p113
      %p116 = scmp.ne.s32.totalorder %s99, %s115
      %p117 = scmp.eq.s32.totalorder %s23, 0
      %p118 = por %p116, %p117
      %p119 = scmp.le.s32.totalorder 1, %s17
      %p120 = scmp.lt.s32.totalorder %s17, 3
      %p121 = pnand %p119, %p120
      %p122 = pneg %p121
      // Predicated region
      $region9: #{tpu_custom_call.1} parent=5 // pred_check
        _
      $region10: #{tpu_custom_call.1} parent=5 // pred_check_branch
        %124 = sbr.rel (%p121) target = $region12
      $region11: #{tpu_custom_call.1} parent=5 // pred_region
        %s125 = ssub.s32 %s17, 1
        // Predicated region
        $region13: #{tpu_custom_call.1} parent=11 // pred_check
          %p126 = pneg %p64
        $region14: #{tpu_custom_call.1} parent=11 // pred_check_branch
          %128 = sbr.rel (%p126) target = $region16
        $region15: #{tpu_custom_call.1} parent=11 // pred_region
          _
        $region16: #{tpu_custom_call.1} parent=11 // pred_fallthru
          _
        // Predicated region
        $region17: #{tpu_custom_call.1} parent=11 // pred_check
          %p129 = pneg %p85
        $region18: #{tpu_custom_call.1} parent=11 // pred_check_branch
          %131 = sbr.rel (%p129) target = $region20
        $region19: #{tpu_custom_call.1} parent=11 // pred_region
          _
        $region20: #{tpu_custom_call.1} parent=11 // pred_fallthru
          _
      $region12: #{tpu_custom_call.1} parent=5 // pred_fallthru
        _
      %p132 = scmp.lt.s32.totalorder %s17, 2
      // Predicated region
      $region21: #{tpu_custom_call.1} parent=5 // pred_check
        %p133 = pneg %p132
      $region22: #{tpu_custom_call.1} parent=5 // pred_check_branch
        %135 = sbr.rel (%p133) target = $region24
      $region23: #{tpu_custom_call.1} parent=5 // pred_region
        // Predicated region
        $region25: #{tpu_custom_call.1} parent=23 // pred_check
          %p136 = pneg %p37
        $region26: #{tpu_custom_call.1} parent=23 // pred_check_branch
          %138 = sbr.rel (%p136) target = $region28
        $region27: #{tpu_custom_call.1} parent=23 // pred_region
          %s139 = sand.u32 %s27, 1
          %s140 = scalar_lea.sflag [#allocation4], %s139
          %s141 = sand.u32 %s27, 1
          %s142 = smul.addr %s141, 8
          %s143 = scalar_lea.vmem [#allocation3], %s142
          %s145 = ssub.s32 128, 128
          %146 = vsyncadd %s140, %s145
          %s147 = smul.addr %s17, 64
          %s148 = scalar_lea.hbm %s0, %s147
          %s149 = sshll.u32 %s143, 4
          %s150 = int_to_ptr.vmem [resolvable:$true] %s149
          %155 = dma.hbm_to_vmem [thread:$0]  %s148, 128, %s150, %s140, 128, 64, 4
        $region28: #{tpu_custom_call.1} parent=23 // pred_fallthru
          _
      $region24: #{tpu_custom_call.1} parent=5 // pred_fallthru
        _
      %p156 = scmp.le.s32.totalorder 1, %s17
      %p157 = scmp.lt.s32.totalorder %s17, 3
      %p158 = pnand %p156, %p157
      %p159 = pneg %p158
      // Predicated region
      $region29: #{tpu_custom_call.1} parent=5 // pred_check
        _
      $region30: #{tpu_custom_call.1} parent=5 // pred_check_branch
        %161 = sbr.rel (%p158) target = $region32
      $region31: #{tpu_custom_call.1} parent=5 // pred_region
        %s162 = ssub.s32 %s17, 1
        %s163 = sand.u32 %s30, 1
        %s164 = scalar_lea.sflag [#allocation4], %s163
        %s165 = sand.u32 %s30, 1
        %s166 = smul.addr %s165, 8
        %s167 = scalar_lea.vmem [#allocation3], %s166
        // Predicated region
        $region33: #{tpu_custom_call.1} parent=31 // pred_check
          %p168 = pneg %p43
        $region34: #{tpu_custom_call.1} parent=31 // pred_check_branch
          %170 = sbr.rel (%p168) target = $region36
        $region35: #{tpu_custom_call.1} parent=31 // pred_region
          %171 = dma.done %s164, 128
        $region36: #{tpu_custom_call.1} parent=31 // pred_fallthru
          _
        %s172 = sand.u32 %s30, 1
        %s173 = scalar_lea.sflag [#allocation4], %s172
        %s174 = sand.u32 %s30, 1
        %s175 = smul.addr %s174, 8
        %s176 = scalar_lea.vmem [#allocation3], %s175
        %p177 = pneg %p43
        %p178 = pneg %p40
        %p179 = pneg %p64
        %p180 = pneg %p61
        %p181 = pneg %p85
        %p182 = pneg %p82
        %p183 = pneg %p111
        %p184 = pneg %p108
        %s185 = sand.u32 %s98, 1
        %s186 = scalar_lea.sflag [#allocation5], %s185
        %s187 = sand.u32 %s98, 1
        %s188 = smul.addr %s187, 2
        %s189 = scalar_lea.vmem [#allocation6], %s188
        %v190 = vld [vmem:[%s167] sm:$0xf]
        %v191 = vld [vmem:[%s167 + $0x4] sm:$0xf]
        %v192 = vld [vmem:[%s1] sm:$0xf]
        %194 = vset.pattern.permute.xlu0 0
        %195 = vperm.xlu0 %194, %v192
        %v196 = vpop.permute.xlu0 %195
        %v198 = vmul.f32 %v190, %v196
        %v199 = vmul.f32 %v191, %v196
        %vm200 = vcmask 1043456
        %v201 = vsel %vm200, %v198, 0.0
        %v202 = vrot.slane %v201, 4
        %v203 = vadd.f32 %v201, %v202
        %v204 = vrot.slane %v203, 2
        %v205 = vadd.f32 %v203, %v204
        %v206 = vrot.slane %v205, 1
        %v207 = vadd.f32 %v205, %v206
        %v208 = vsel %vm200, %v199, 0.0
        %v209 = vrot.slane %v208, 4
        %v210 = vadd.f32 %v208, %v209
        %v211 = vrot.slane %v210, 2
        %v212 = vadd.f32 %v210, %v211
        %v213 = vrot.slane %v212, 1
        %v214 = vadd.f32 %v212, %v213
        %v215 = vld [vmem:[#allocation2] sm:$0x1]
        %v217 = vlaneseq
        %v218 = vshrl.u32 %v217, 7
        %v219 = vsub.s32 0, %v218
        %v220 = vrot.slane %v215, %v219
        %221 = vset.pattern.permute.xlu0 0
        %222 = vperm.xlu0 %221, %v220
        %v223 = vpop.permute.xlu0 %222
        %v225 = vadd.f32 %v207, %v223
        %v226 = vadd.f32 %v214, %v223
        %v227 = vxor.u32 %v225, 2147483648
        %v228 = vxor.u32 %v226, 2147483648
        %v229 = vmul.f32 %v227, 1.442695
        %v230 = vpow.pop %v229
        %v231 = vmul.f32 %v228, 1.442695
        %v232 = vpow.pop %v231
        %v233 = vadd.f32 %v230, 1.0
        %v234 = vadd.f32 %v232, 1.0
        %v235 = vrcp.pop %v233
        %v236 = vmul.f32 1.0, %v235
        %v237 = vrcp.pop %v234
        %v238 = vmul.f32 1.0, %v237
        %vm241 = vcmask 1041409
        %v242 = vsel %vm241, %v238, %v236
        %244 = vst [vmem:[%s189] sm:$0x3] %v242
        %s245 = sand.u32 %s98, 1
        %s246 = scalar_lea.sflag [#allocation5], %s245
        %s247 = sand.u32 %s98, 1
        %s248 = smul.addr %s247, 2
        %s249 = scalar_lea.vmem [#allocation6], %s248
        // Predicated region
        $region37: #{tpu_custom_call.1} parent=31 // pred_check
          %p250 = pneg %p108
        $region38: #{tpu_custom_call.1} parent=31 // pred_check_branch
          %252 = sbr.rel (%p250) target = $region40
        $region39: #{tpu_custom_call.1} parent=31 // pred_region
          %s254 = ssub.s32 32, 32
          %255 = vsyncadd %s246, %s254
          %s256 = smul.addr %s22, 32
          %s257 = scalar_lea.hbm %s3, %s256
          %s259 = sshll.u32 %s249, 4
          %s260 = int_to_ptr.vmem [resolvable:$true] %s259
          %262 = dma.vmem_to_hbm [thread:$0]  %s260, 32, %s257, %s246
        $region40: #{tpu_custom_call.1} parent=31 // pred_fallthru
          _
      $region32: #{tpu_custom_call.1} parent=5 // pred_fallthru
        _
      %p263 = scmp.le.s32.totalorder 2, %s17
      // Predicated region
      $region41: #{tpu_custom_call.1} parent=5 // pred_check
        %p264 = pneg %p263
      $region42: #{tpu_custom_call.1} parent=5 // pred_check_branch
        %266 = sbr.rel (%p264) target = $region44
      $region43: #{tpu_custom_call.1} parent=5 // pred_region
        %s267 = ssub.s32 %s17, 2
        // Predicated region
        $region45: #{tpu_custom_call.1} parent=43 // pred_check
          %p268 = pneg %p114
        $region46: #{tpu_custom_call.1} parent=43 // pred_check_branch
          %270 = sbr.rel (%p268) target = $region48
        $region47: #{tpu_custom_call.1} parent=43 // pred_region
          %s271 = sand.u32 %s99, 1
          %s272 = scalar_lea.sflag [#allocation5], %s271
          %s273 = sand.u32 %s99, 1
          %s274 = smul.addr %s273, 2
          %s275 = scalar_lea.vmem [#allocation6], %s274
          %276 = dma.done %s272, 32
        $region48: #{tpu_custom_call.1} parent=43 // pred_fallthru
          _
      $region44: #{tpu_custom_call.1} parent=5 // pred_fallthru
        _
    $region6: #{tpu_custom_call.1} parent=1 // loop_footer
      %s21 = sadd.s32 1, %s17
    $region7: #{tpu_custom_call.1} parent=1 // loop_footer_branch
      %16 = sbr.rel target = $region3
    $region8: #{tpu_custom_call.1} parent=1 // loop_exit
      _
    %277 = vsyncpa [#allocation4], 1
    %s278 = scalar_lea.sflag [#allocation4], 1
    %279 = vsyncpa %s278, 1
    %280 = vsyncpa [#allocation5], 1
    %s281 = scalar_lea.sflag [#allocation5], 1
    %282 = vsyncpa %s281, 1

</llo_original>
